<compile_context>
chip_gen: v6e
topology: v6e:2x2x1
jax: 0.10.0
libtpu: 0.0.40
codegen_flags: <defaults>
</compile_context>

<pallas_src>
import jax
import jax.numpy as jnp
from jax.experimental import pallas as pl
from jax.experimental.pallas import tpu as pltpu


def _make_chomp_kernel(needs_slice: bool):
    if needs_slice:
        # Input tile covers the full row (incl. chomped tail); slice statically.
        def kernel(x_ref, o_ref):
            o_ref[...] = x_ref[:, : o_ref.shape[-1]]
    else:
        # Input tile already covers only the kept window -> pure copy.
        def kernel(x_ref, o_ref):
            o_ref[...] = x_ref[...]
    return kernel


def _pick_tiles(r: int, l: int, l_out: int, itemsize: int):
    """Choose (row_tile, in_lane_tile, out_lane_tile, needs_slice)."""
    # Sublane multiple: sub-32-bit dtypes pack along sublanes.
    sub_mult = 8 * max(1, 4 // itemsize)   # f32 -> 8, bf16 -> 16, int8 -> 32

    # Row tile: full extent when small (always legal), else a packed multiple.
    if r <= 512:
        tr = r
    else:
        tr = 512  # multiple of 8/16/32

    if l_out >= 128:
        # Lane tile: multiple of 128 (dense vst), capped by a ~2 MiB tile
        # budget so double-buffered in+out stays small in VMEM.
        max_tile_bytes = 2 * 1024 * 1024
        cap_by_bytes = max(128, (max_tile_bytes // max(1, tr * itemsize)) // 128 * 128)
        tl_out = min(2048, (l_out // 128) * 128, cap_by_bytes)
        tl_in = tl_out
        needs_slice = False
    else:
        # Tiny L_out: must use full-extent lane blocks; chomp inside kernel.
        tl_out = l_out
        tl_in = l
        needs_slice = True

    # unused, but keep sub_mult referenced for clarity of intent
    del sub_mult
    return tr, tl_in, tl_out, needs_slice


def chomp1d(x: jax.Array, chomp_size: int) -> jax.Array:
    """Equivalent of torch Chomp1d: x[:, :, :-chomp_size].contiguous()."""
    n, c, l = x.shape
    assert 0 < chomp_size < l, "chomp_size must be in (0, L)"
    l_out = l - chomp_size

    # Collapse batch and channel into one row axis (free, contiguous view).
    r = n * c
    x2d = x.reshape(r, l)

    itemsize = jnp.dtype(x.dtype).itemsize
    tr, tl_in, tl_out, needs_slice = _pick_tiles(r, l, l_out, itemsize)

    grid = (pl.cdiv(r, tr), pl.cdiv(l_out, tl_out))

    out2d = pl.pallas_call(
        _make_chomp_kernel(needs_slice),
        out_shape=jax.ShapeDtypeStruct((r, l_out), x.dtype),
        grid_spec=pltpu.PrefetchScalarGridSpec(
            num_scalar_prefetch=0,
            grid=grid,
            in_specs=[
                pl.BlockSpec((tr, tl_in), lambda i, j: (i, j)),
            ],
            out_specs=pl.BlockSpec((tr, tl_out), lambda i, j: (i, j)),
        ),
        compiler_params=pltpu.CompilerParams(
            dimension_semantics=("parallel", "parallel"),
        ),
    )(x2d)

    return out2d.reshape(n, c, l_out)


if __name__ == "__main__":
    key = jax.random.PRNGKey(0)

    # Case 1: small shape consistent with the module (tiny-L_out fallback).
    N, C, L, chomp = 2, 4, 16, 3
    x = jax.random.normal(key, (N, C, L), dtype=jnp.float32)
    out = jax.block_until_ready(chomp1d(x, chomp))
    ref = x[:, :, :-chomp]
    assert out.shape == (N, C, L - chomp), out.shape
    assert out.dtype == x.dtype
    assert jnp.array_equal(out, ref), "Pallas Chomp1d mismatch (small case)"

    # Case 2: lane-aligned tiled path with a partial (masked) last L-tile.
    N2, C2, L2, chomp2 = 2, 4, 272, 13   # L_out = 259 >= 128 -> tiled path
    x2 = jax.random.normal(jax.random.PRNGKey(1), (N2, C2, L2),
                           dtype=jnp.float32)
    out2 = jax.block_until_ready(chomp1d(x2, chomp2))
    ref2 = x2[:, :, :-chomp2]
    assert out2.shape == (N2, C2, L2 - chomp2), out2.shape
    assert jnp.array_equal(out2, ref2), "Pallas Chomp1d mismatch (tiled case)"

    # Case 3: bf16 (sublane-packed dtype) through the tiled path.
    N3, C3, L3, chomp3 = 2, 4, 384, 2    # L_out = 382
    x3 = jax.random.normal(jax.random.PRNGKey(2), (N3, C3, L3),
                           dtype=jnp.bfloat16)
    out3 = jax.block_until_ready(chomp1d(x3, chomp3))
    ref3 = x3[:, :, :-chomp3]
    assert out3.shape == (N3, C3, L3 - chomp3), out3.shape
    assert jnp.array_equal(out3, ref3), "Pallas Chomp1d mismatch (bf16 case)"

    print("KERNEL_OK")
</pallas_src>

<mosaic_0001>
module attributes {stable_mosaic.version = 11 : i64} {
  func.func @kernel(%arg0: i32, %arg1: i32, %arg2: memref<8x16xf32, #tpu.memory_space<vmem>>, %arg3: memref<8x13xf32, #tpu.memory_space<vmem>>) attributes {dimension_semantics = [#tpu.dimension_semantics<parallel>, #tpu.dimension_semantics<parallel>], iteration_bounds = array<i64: 1, 1>, scalar_prefetch = 0 : i64, scratch_operands = 0 : i64, tpu.core_type = #tpu.core_type<tc>, window_params = [{transform_indices = @transform_0, window_bounds = array<i64: 8, 16>}, {transform_indices = @transform_1, window_bounds = array<i64: 8, 13>}]} {
    %c0 = arith.constant 0 : index
    %c0_0 = arith.constant 0 : index
    %0 = vector.load %arg2[%c0, %c0_0] : memref<8x16xf32, #tpu.memory_space<vmem>>, vector<8x13xf32>
    %c0_1 = arith.constant 0 : index
    %c0_2 = arith.constant 0 : index
    %1 = vector.load %arg3[%c0_1, %c0_2] : memref<8x13xf32, #tpu.memory_space<vmem>>, vector<8x13xf32>
    tpu.vector_store %arg3[%c0_1, %c0_2], %0 {strides = array<i32>} : memref<8x13xf32, #tpu.memory_space<vmem>>, vector<8x13xf32>,
    return
  }
  func.func @transform_0(%arg0: i32, %arg1: i32) -> (i32, i32) {
    %c0_i32 = arith.constant 0 : i32
    return %arg0, %arg1 : i32, i32
  }
  func.func @transform_1(%arg0: i32, %arg1: i32) -> (i32, i32) {
    %c0_i32 = arith.constant 0 : i32
    return %arg0, %arg1 : i32, i32
  }
}

</mosaic_0001>

<llo_original>
// kernel: tpu_custom_call.1
$region0: #{tpu_custom_call.1}
  #allocation0 [shape = 'u32[]', space=smem, size = 0x4, offset = 0x4, fixed_abs, tag = 'smem constant byte address 0x4 - core index']
  #allocation1 [shape = 'u32[144,128]{1,0:T(1,128)}', space=vmem, size = 0x12000, scoped, tag = 'internal scratch']
  %s0 = inlined_call_operand.hbm [shape: f32[8,16], index: 0, kind: input, shape index: {}]
  %s1 = inlined_call_operand.hbm [shape: f32[8,13], index: 1, kind: output, shape index: {}]
  %s2 = sld [smem:[#allocation0]]
  $region18: #{tpu_custom_call.1} parent=0
    _
  %s4 = ssub.s32 1, %s2
  %s5 = scalar_select 0, %s4, %s2
  $region1: #{tpu_custom_call.1} parent=0
    #allocation2 [shape = 'u8[4096]{0}', space=vmem, size = 0x1000, scoped, tag = 'input window, operand 0, single buffered']
    #allocation3 [shape = 's32[1]{0}', space=sflag, size = 0x4, scoped, tag = 'scoped memory for tpu_custom_call.1']
    #allocation4 [shape = 's32[1]{0}', space=sflag, size = 0x4, scoped, tag = 'scoped memory for tpu_custom_call.1']
    #allocation5 [shape = 'u8[4096]{0}', space=vmem, size = 0x1000, scoped, tag = 'output window, operand 0, single buffered']
    %6 = vsyncpa [#allocation3], 0
    %7 = vsyncpa [#allocation4], 0
    // Predicated region
    $region2: #{tpu_custom_call.1} parent=1 // pred_check
      _
    $region3: #{tpu_custom_call.1} parent=1 // pred_check_branch
      %9 = sbr.rel (0) target = $region5
    $region4: #{tpu_custom_call.1} parent=1 // pred_region
      %s11 = ssub.s32 128, 128
      %12 = vsyncadd [#allocation3], %s11
      %s14 = sshll.u32 [#allocation2], 4
      %s15 = int_to_ptr.vmem [resolvable:$true] %s14
      %17 = dma.hbm_to_vmem [thread:$0]  %s0, 128, %s15, [#allocation3]
    $region5: #{tpu_custom_call.1} parent=1 // pred_fallthru
      _
    // Predicated region
    $region6: #{tpu_custom_call.1} parent=1 // pred_check
      _
    $region7: #{tpu_custom_call.1} parent=1 // pred_check_branch
      %19 = sbr.rel (0) target = $region9
    $region8: #{tpu_custom_call.1} parent=1 // pred_region
      %20 = dma.done [#allocation3], 128
    $region9: #{tpu_custom_call.1} parent=1 // pred_fallthru
      _
    %v21 = vld [vmem:[#allocation2] sm:$0xff]
    %vm22 = vcmask 105472
    %23 = vst.msk [vmem:[#allocation5] sm:$0xff] %vm22, %v21
    // Predicated region
    $region10: #{tpu_custom_call.1} parent=1 // pred_check
      _
    $region11: #{tpu_custom_call.1} parent=1 // pred_check_branch
      %25 = sbr.rel (0) target = $region13
    $region12: #{tpu_custom_call.1} parent=1 // pred_region
      %s27 = ssub.s32 128, 128
      %28 = vsyncadd [#allocation4], %s27
      %s30 = sshll.u32 [#allocation5], 4
      %s31 = int_to_ptr.vmem [resolvable:$true] %s30
      %33 = dma.vmem_to_hbm [thread:$0]  %s31, 128, %s1, [#allocation4]
    $region13: #{tpu_custom_call.1} parent=1 // pred_fallthru
      _
    // Predicated region
    $region14: #{tpu_custom_call.1} parent=1 // pred_check
      _
    $region15: #{tpu_custom_call.1} parent=1 // pred_check_branch
      %35 = sbr.rel (0) target = $region17
    $region16: #{tpu_custom_call.1} parent=1 // pred_region
      %36 = dma.done [#allocation4], 128
    $region17: #{tpu_custom_call.1} parent=1 // pred_fallthru
      _
    %37 = vsyncpa [#allocation3], 1
    %38 = vsyncpa [#allocation4], 1

</llo_original>
